<compile_context>
chip_gen: v6e
topology: v6e:2x2x1
jax: 0.10.0
libtpu: 0.0.40
codegen_flags: <defaults>
</compile_context>

<pallas_src>
import functools

import jax
import jax.numpy as jnp
from jax.experimental import pallas as pl
from jax.experimental.pallas import tpu as pltpu


def _patch_embed_kernel(x_ref, w_ref, b_ref, o_ref, *, tn):
    """One (batch, seq-tile) step.

    x_ref : (1, C, TN) per-tile slab  OR  (1, C, Npad) batch-resident slab
    w_ref : (C, O)     projection weight (in_features, out_features), resident
    b_ref : (1, O)     projection bias, resident
    o_ref : (1, TN, O) output tile (token-major, lane-dense in O)
    """
    if x_ref.shape[-1] == tn:
        x_cn = x_ref[0]                                    # (C, TN)
    else:
        # Batch-resident x: slice the current sequence tile out of the full
        # (C, Npad) slab. tn is 128-aligned on this path -> aligned lane slice.
        j = pl.program_id(1)
        align = 128 if tn % 128 == 0 else 8
        start = pl.multiple_of(j * tn, align)
        x_cn = x_ref[0, :, pl.ds(start, tn)]               # (C, TN)

    # Fused rearrange: contract the leading (channel) axis of the LHS,
    # (C, TN)^T @ (C, O) -> (TN, O). Transposed-LHS MXU matmul, fp32 accumulate.
    y = jax.lax.dot_general(
        x_cn, w_ref[...],
        dimension_numbers=(((0,), (0,)), ((), ())),
        preferred_element_type=jnp.float32)                # (TN, O)
    y = y + b_ref[0].astype(jnp.float32)
    o_ref[0] = y.astype(o_ref.dtype)


def _pick_seq_tile(N, O, B, out_itemsize):
    """Pick (tile, padded_N). Tile is as large as the VMEM budget allows,
    guarantees >= 2 total grid steps when possible, and keeps (8,128)-friendly
    blocks (128-aligned tiles, or the full padded axis)."""
    vmem_budget = 24 * 1024 * 1024          # for the double-buffered output tile
    min_steps = 2                           # >=2 steps: v7x 2nd TC + writeback overlap

    def fits(t):
        return 2 * t * O * out_itemsize <= vmem_budget

    # 1) Prefer a 128-aligned tile that divides N exactly (no padding).
    for t in (2048, 1024, 512, 256, 128):
        if t <= N and N % t == 0 and fits(t) and B * (N // t) >= min_steps:
            return t, N
    # 2) Otherwise pad N up to a multiple of a 128-aligned tile (bounded waste).
    for t in (2048, 1024, 512, 256, 128):
        if fits(t):
            n_pad = ((N + t - 1) // t) * t
            if B * (n_pad // t) >= min_steps and (n_pad - N) * 4 <= n_pad:
                return t, n_pad
    # 3) Last resort: one full-row tile, padded to a sublane multiple.
    n_pad = ((N + 7) // 8) * 8
    return n_pad, n_pad


def patch_embedding_forward(x, w, b, *, out_dtype=None):
    """x: (B, C, H, W), w: (C, O), b: (1, O) -> (B, H*W, O)."""
    B, C, H, W = x.shape
    N = H * W
    O = w.shape[1]
    out_dtype = out_dtype if out_dtype is not None else x.dtype

    x_item = jnp.dtype(x.dtype).itemsize
    w_item = jnp.dtype(w.dtype).itemsize
    b_item = jnp.dtype(b.dtype).itemsize
    o_item = jnp.dtype(out_dtype).itemsize

    tn, n_pad = _pick_seq_tile(N, O, B, o_item)

    # Contiguous reshape only (free); the channel<->token transpose is fused
    # inside the kernel's matmul.
    x3 = x.reshape(B, C, N)
    if n_pad != N:
        x3 = jnp.pad(x3, ((0, 0), (0, 0), (0, n_pad - N)))

    # Make x resident per batch when it is tiny (one contiguous DMA per batch);
    # only take this path when the in-kernel lane slice stays 128-aligned.
    x_resident = (C * n_pad * x_item <= 4 * 1024 * 1024) and (
        tn % 128 == 0 or tn == n_pad)
    if x_resident:
        x_spec = pl.BlockSpec((1, C, n_pad), lambda bi, j: (bi, 0, 0))
        x_block_n = n_pad
    else:
        x_spec = pl.BlockSpec((1, C, tn), lambda bi, j: (bi, 0, j))
        x_block_n = tn

    grid = (B, n_pad // tn)

    # Explicit VMEM budget (out double-buffered + x + resident w/b) with headroom,
    # clamped under v7x's 64 MiB physical VMEM.
    vmem_needed = (2 * tn * O * o_item
                   + 2 * C * x_block_n * x_item
                   + 2 * C * O * w_item
                   + 2 * O * b_item)
    vmem_limit = min(int(vmem_needed * 1.5) + (4 << 20), 64 << 20)

    cost = pl.CostEstimate(
        flops=2 * B * N * C * O,
        transcendentals=0,
        bytes_accessed=(B * C * N * x_item + C * O * w_item + O * b_item
                        + B * N * O * o_item))

    kernel = functools.partial(_patch_embed_kernel, tn=tn)

    out = pl.pallas_call(
        kernel,
        out_shape=jax.ShapeDtypeStruct((B, n_pad, O), out_dtype),
        grid_spec=pltpu.PrefetchScalarGridSpec(
            num_scalar_prefetch=0,
            grid=grid,
            in_specs=[
                x_spec,                                            # activations
                pl.BlockSpec((C, O), lambda bi, j: (0, 0)),        # weight (resident)
                pl.BlockSpec((1, O), lambda bi, j: (0, 0)),        # bias   (resident)
            ],
            out_specs=pl.BlockSpec((1, tn, O), lambda bi, j: (bi, j, 0)),
        ),
        compiler_params=pltpu.CompilerParams(
            dimension_semantics=("parallel", "parallel"),
            vmem_limit_bytes=vmem_limit),
        cost_estimate=cost,
    )(x3, w, b)

    if n_pad != N:
        out = out[:, :N, :]
    return out


def patch_embedding_reference(x, w, b):
    """Pure-JAX reference mirroring the PyTorch forward."""
    B, C, H, W = x.shape
    xr = jnp.transpose(x.reshape(B, C, H * W), (0, 2, 1))   # b (h w) c
    return xr @ w + b[0]


if __name__ == "__main__":
    # Small shapes consistent with the module: batch=2, in_cdim=4, 16x16 spatial,
    # out_cdim=768 (module default).
    B, C, H, W = 2, 4, 16, 16
    O = 768

    key = jax.random.PRNGKey(0)
    kx, kw, kb = jax.random.split(key, 3)

    x = jax.random.normal(kx, (B, C, H, W), dtype=jnp.float32)

    # PyTorch nn.Linear-like uniform init; weight stored as (in, out).
    bound = 1.0 / (C ** 0.5)
    w = jax.random.uniform(kw, (C, O), jnp.float32, -bound, bound)
    b = jax.random.uniform(kb, (1, O), jnp.float32, -bound, bound)

    out = patch_embedding_forward(x, w, b)
    out = jax.block_until_ready(out)

    ref = patch_embedding_reference(x, w, b)
    assert out.shape == (B, H * W, O), out.shape
    err = jnp.max(jnp.abs(out - ref))
    assert jnp.allclose(out, ref, atol=1e-4, rtol=1e-4), f"max abs err {err}"

    print("KERNEL_OK")
</pallas_src>

<mosaic_0001>
module attributes {stable_mosaic.version = 11 : i64} {
  func.func @_patch_embed_kernel(%arg0: i32, %arg1: i32, %arg2: memref<1x4x256xf32, #tpu.memory_space<vmem>>, %arg3: memref<4x768xf32, #tpu.memory_space<vmem>>, %arg4: memref<1x768xf32, #tpu.memory_space<vmem>>, %arg5: memref<1x256x768xf32, #tpu.memory_space<vmem>>) attributes {dimension_semantics = [#tpu.dimension_semantics<parallel>, #tpu.dimension_semantics<parallel>], iteration_bounds = array<i64: 2, 1>, scalar_prefetch = 0 : i64, scratch_operands = 0 : i64, tpu.core_type = #tpu.core_type<tc>, window_params = [{transform_indices = @transform_0, window_bounds = array<i64: 1, 4, 256>}, {pipeline_mode = #tpu.pipeline_mode<synchronous>, transform_indices = @transform_1, window_bounds = array<i64: 4, 768>}, {pipeline_mode = #tpu.pipeline_mode<synchronous>, transform_indices = @transform_2, window_bounds = array<i64: 1, 768>}, {transform_indices = @transform_3, window_bounds = array<i64: 1, 256, 768>}]} {
    %c0 = arith.constant 0 : index
    %c0_0 = arith.constant 0 : index
    %c0_1 = arith.constant 0 : index
    %0 = vector.load %arg2[%c0, %c0_0, %c0_1] : memref<1x4x256xf32, #tpu.memory_space<vmem>>, vector<1x4x256xf32>
    %1 = vector.shape_cast %0 : vector<1x4x256xf32> to vector<4x256xf32>
    %c0_2 = arith.constant 0 : index
    %c0_3 = arith.constant 0 : index
    %2 = vector.load %arg3[%c0_2, %c0_3] : memref<4x768xf32, #tpu.memory_space<vmem>>, vector<4x768xf32>
    %cst = arith.constant dense<0.000000e+00> : vector<256x768xf32>
    %3 = tpu.matmul %1, %2, %cst {dimension_numbers = #tpu.dot_dimension_numbers<[0], [0], [1], [1], [0, 1, 1, 1], [], []>} : vector<4x256xf32>, vector<4x768xf32>, vector<256x768xf32> -> vector<256x768xf32>
    %c0_4 = arith.constant 0 : index
    %c0_5 = arith.constant 0 : index
    %4 = vector.load %arg4[%c0_4, %c0_5] : memref<1x768xf32, #tpu.memory_space<vmem>>, vector<1x768xf32>
    %5 = vector.shape_cast %4 : vector<1x768xf32> to vector<768xf32>
    %6 = vector.shape_cast %5 : vector<768xf32> to vector<1x768xf32>
    %7 = vector.broadcast %6 : vector<1x768xf32> to vector<256x768xf32>
    %8 = arith.addf %3, %7 : vector<256x768xf32>
    %c0_6 = arith.constant 0 : index
    %c0_7 = arith.constant 0 : index
    %c0_8 = arith.constant 0 : index
    %9 = vector.load %arg5[%c0_6, %c0_7, %c0_8] : memref<1x256x768xf32, #tpu.memory_space<vmem>>, vector<1x256x768xf32>
    %10 = vector.shape_cast %9 : vector<1x256x768xf32> to vector<256x768xf32>
    %11 = vector.shape_cast %8 : vector<256x768xf32> to vector<1x256x768xf32>
    tpu.vector_store %arg5[%c0_6, %c0_7, %c0_8], %11 {strides = array<i32>} : memref<1x256x768xf32, #tpu.memory_space<vmem>>, vector<1x256x768xf32>,
    return
  }
  func.func @transform_0(%arg0: i32, %arg1: i32) -> (i32, i32, i32) {
    %c0_i32 = arith.constant 0 : i32
    %c0_i32_0 = arith.constant 0 : i32
    %c0_i32_1 = arith.constant 0 : i32
    return %arg0, %c0_i32, %c0_i32_0 : i32, i32, i32
  }
  func.func @transform_1(%arg0: i32, %arg1: i32) -> (i32, i32) {
    %c0_i32 = arith.constant 0 : i32
    %c0_i32_0 = arith.constant 0 : i32
    %c0_i32_1 = arith.constant 0 : i32
    return %c0_i32, %c0_i32_0 : i32, i32
  }
  func.func @transform_2(%arg0: i32, %arg1: i32) -> (i32, i32) {
    %c0_i32 = arith.constant 0 : i32
    %c0_i32_0 = arith.constant 0 : i32
    %c0_i32_1 = arith.constant 0 : i32
    return %c0_i32, %c0_i32_0 : i32, i32
  }
  func.func @transform_3(%arg0: i32, %arg1: i32) -> (i32, i32, i32) {
    %c0_i32 = arith.constant 0 : i32
    %c0_i32_0 = arith.constant 0 : i32
    return %arg0, %arg1, %c0_i32 : i32, i32, i32
  }
}

</mosaic_0001>

<llo_original>
// kernel: tpu_custom_call.1
$region0: #{tpu_custom_call.1}
  #allocation0 [shape = 'u32[]', space=smem, size = 0x4, offset = 0x4, fixed_abs, tag = 'smem constant byte address 0x4 - core index']
  #allocation1 [shape = 'u32[144,128]{1,0:T(1,128)}', space=vmem, size = 0x12000, scoped, tag = 'internal scratch']
  %s0 = inlined_call_operand.hbm [shape: f32[2,4,256], index: 0, kind: input, shape index: {}]
  %s1 = inlined_call_operand.hbm [shape: f32[4,768], index: 1, kind: input, shape index: {}]
  %s2 = inlined_call_operand.hbm [shape: f32[1,768], index: 2, kind: input, shape index: {}]
  %s3 = inlined_call_operand.hbm [shape: f32[2,256,768], index: 3, kind: output, shape index: {}]
  %s4 = sld [smem:[#allocation0]]
  $region57: #{tpu_custom_call.1} parent=0
    _
  %s6 = ssub.s32 1, %s4
  %s7 = scalar_select 0, %s6, %s4
  $region1: #{tpu_custom_call.1} parent=0
    #allocation2 [shape = 'u8[8192]{0}', space=vmem, size = 0x2000, scoped, tag = 'input window, operand 0']
    #allocation3 [shape = 's32[2]{0}', space=sflag, size = 0x8, scoped, tag = 'scoped memory for tpu_custom_call.1']
    #allocation4 [shape = 's32[2]{0}', space=sflag, size = 0x8, scoped, tag = 'scoped memory for tpu_custom_call.1']
    #allocation5 [shape = 'u8[12288]{0}', space=vmem, size = 0x3000, scoped, tag = 'input window, operand 1, single buffered']
    #allocation6 [shape = 's32[1]{0}', space=sflag, size = 0x4, scoped, tag = 'scoped memory for tpu_custom_call.1']
    #allocation7 [shape = 'u8[3072]{0}', space=vmem, size = 0xc00, scoped, tag = 'input window, operand 2, single buffered']
    #allocation8 [shape = 'u8[1572864]{0}', space=vmem, size = 0x180000, scoped, tag = 'output window, operand 0']
    %8 = vsyncpa [#allocation3], 0
    %s9 = scalar_lea.sflag [#allocation3], 1
    %10 = vsyncpa %s9, 0
    %11 = vsyncpa [#allocation6], 0
    %12 = vsyncpa [#allocation4], 0
    %s13 = scalar_lea.sflag [#allocation4], 1
    %14 = vsyncpa %s13, 0
    loop: start=0, step=1, limit=4
    $region2: #{tpu_custom_call.1} parent=1 // loop_pre_header
      _
    $region3: #{tpu_custom_call.1} parent=1 // loop_header
      %s16 = sphi 0, %s20
      %p17 = scmp.ge.s32.totalorder %s16, 4
      %s23 = sphi 0, %s35
      %s24 = sphi 0, %s31
      %s25 = sphi 0, %s23
      %s26 = sphi 0, %s24
      %s27 = sphi 0, %s25
      %s28 = sphi 0, %s26
      %s38 = sphi 0, %s40
      %s41 = sphi 0, %s38
      %s42 = sphi 0, %s41
      %s58 = sphi 0, %s42
      %s62 = sphi 0, %s62
      %s64 = sphi 0, %s62
      %s65 = sphi 0, %s64
      %s79 = sphi 0, %s65
      %s83 = sphi 0, %s83
      %s85 = sphi 0, %s83
      %s86 = sphi 0, %s85
      %s100 = sphi 0, %s86
      %s108 = sphi 0, %s110
      %s111 = sphi 0, %s108
      %s112 = sphi 0, %s111
      %s128 = sphi 0, %s112
    $region4: #{tpu_custom_call.1} parent=1 // loop_header_branch
      %19 = sbr.rel (%p17) target = $region8
    $region5: #{tpu_custom_call.1} parent=1 // loop_body
      %s21 = ssub.s32 %s16, 1
      %s22 = ssub.s32 %s16, 2
      %s29 = sadd.s32 1, %s24
      %p30 = scmp.ge.s32.totalorder %s29, 1
      %s31 = scalar_select %p30, 0, %s29
      %s32 = sadd.s32 1, %s23
      %s33 = scalar_select %p30, %s32, %s23
      %p34 = scmp.ge.s32.totalorder %s33, 2
      %s35 = scalar_select %p34, 0, %s33
      %s36 = ssub.s32 %s23, %s35
      %p37 = scmp.eq.s32.totalorder %s36, 0
      %s39 = sadd.s32 %s38, 1
      %s40 = scalar_select %p37, %s38, %s39
      %p43 = pneg %p37
      %p44 = scmp.eq.s32.totalorder %s16, 1
      %p45 = por %p43, %p44
      %p46 = scmp.ne.s32.totalorder %s38, %s41
      %p47 = scmp.eq.s32.totalorder %s16, 0
      %p48 = por %p46, %p47
      %p49 = scmp.ne.s32.totalorder %s38, %s41
      %p50 = scmp.eq.s32.totalorder %s21, 1
      %p51 = por %p49, %p50
      %p52 = scmp.ne.s32.totalorder %s41, %s42
      %p53 = scmp.eq.s32.totalorder %s21, 0
      %p54 = por %p52, %p53
      %p55 = scmp.ne.s32.totalorder %s41, %s42
      %p56 = scmp.eq.s32.totalorder %s22, 1
      %p57 = por %p55, %p56
      %p59 = scmp.ne.s32.totalorder %s42, %s58
      %p60 = scmp.eq.s32.totalorder %s22, 0
      %p61 = por %p59, %p60
      %s63 = sadd.s32 %s62, 1
      %p66 = scmp.eq.s32.totalorder %s16, 1
      %p67 = scmp.ne.s32.totalorder %s62, %s64
      %p68 = scmp.eq.s32.totalorder %s16, 0
      %p69 = por %p67, %p68
      %p70 = scmp.ne.s32.totalorder %s62, %s64
      %p71 = scmp.eq.s32.totalorder %s21, 1
      %p72 = por %p70, %p71
      %p73 = scmp.ne.s32.totalorder %s64, %s65
      %p74 = scmp.eq.s32.totalorder %s21, 0
      %p75 = por %p73, %p74
      %p76 = scmp.ne.s32.totalorder %s64, %s65
      %p77 = scmp.eq.s32.totalorder %s22, 1
      %p78 = por %p76, %p77
      %p80 = scmp.ne.s32.totalorder %s65, %s79
      %p81 = scmp.eq.s32.totalorder %s22, 0
      %p82 = por %p80, %p81
      %s84 = sadd.s32 %s83, 1
      %p87 = scmp.eq.s32.totalorder %s16, 1
      %p88 = scmp.ne.s32.totalorder %s83, %s85
      %p89 = scmp.eq.s32.totalorder %s16, 0
      %p90 = por %p88, %p89
      %p91 = scmp.ne.s32.totalorder %s83, %s85
      %p92 = scmp.eq.s32.totalorder %s21, 1
      %p93 = por %p91, %p92
      %p94 = scmp.ne.s32.totalorder %s85, %s86
      %p95 = scmp.eq.s32.totalorder %s21, 0
      %p96 = por %p94, %p95
      %p97 = scmp.ne.s32.totalorder %s85, %s86
      %p98 = scmp.eq.s32.totalorder %s22, 1
      %p99 = por %p97, %p98
      %p101 = scmp.ne.s32.totalorder %s86, %s100
      %p102 = scmp.eq.s32.totalorder %s22, 0
      %p103 = por %p101, %p102
      %s104 = ssub.s32 %s23, %s35
      %s105 = ssub.s32 %s24, %s31
      %s106 = sor.u32 %s104, %s105
      %p107 = scmp.eq.s32.totalorder %s106, 0
      %s109 = sadd.s32 %s108, 1
      %s110 = scalar_select %p107, %s108, %s109
      %p113 = pneg %p107
      %p114 = scmp.eq.s32.totalorder %s16, 1
      %p115 = por %p113, %p114
      %p116 = scmp.ne.s32.totalorder %s108, %s111
      %p117 = scmp.eq.s32.totalorder %s16, 0
      %p118 = por %p116, %p117
      %p119 = scmp.ne.s32.totalorder %s108, %s111
      %p120 = scmp.eq.s32.totalorder %s21, 1
      %p121 = por %p119, %p120
      %p122 = scmp.ne.s32.totalorder %s111, %s112
      %p123 = scmp.eq.s32.totalorder %s21, 0
      %p124 = por %p122, %p123
      %p125 = scmp.ne.s32.totalorder %s111, %s112
      %p126 = scmp.eq.s32.totalorder %s22, 1
      %p127 = por %p125, %p126
      %p129 = scmp.ne.s32.totalorder %s112, %s128
      %p130 = scmp.eq.s32.totalorder %s22, 0
      %p131 = por %p129, %p130
      %p132 = scmp.le.s32.totalorder 1, %s16
      %p133 = scmp.lt.s32.totalorder %s16, 3
      %p134 = pnand %p132, %p133
      %p135 = pneg %p134
      // Predicated region
      $region9: #{tpu_custom_call.1} parent=5 // pred_check
        _
      $region10: #{tpu_custom_call.1} parent=5 // pred_check_branch
        %137 = sbr.rel (%p134) target = $region12
      $region11: #{tpu_custom_call.1} parent=5 // pred_region
        %s138 = ssub.s32 %s16, 1
        // Predicated region
        $region13: #{tpu_custom_call.1} parent=11 // pred_check
          %p139 = pneg %p75
        $region14: #{tpu_custom_call.1} parent=11 // pred_check_branch
          %141 = sbr.rel (%p139) target = $region16
        $region15: #{tpu_custom_call.1} parent=11 // pred_region
          %s143 = ssub.s32 384, 384
          %144 = vsyncadd [#allocation6], %s143
          %s146 = sshll.u32 [#allocation5], 4
          %s147 = int_to_ptr.vmem [resolvable:$true] %s146
          %149 = dma.hbm_to_vmem [thread:$0]  %s1, 384, %s147, [#allocation6]
        $region16: #{tpu_custom_call.1} parent=11 // pred_fallthru
          _
        // Predicated region
        $region17: #{tpu_custom_call.1} parent=11 // pred_check
          %p150 = pneg %p96
        $region18: #{tpu_custom_call.1} parent=11 // pred_check_branch
          %152 = sbr.rel (%p150) target = $region20
        $region19: #{tpu_custom_call.1} parent=11 // pred_region
          %s154 = ssub.s32 96, 96
          %155 = vsyncadd [#allocation6], %s154
          %s157 = sshll.u32 [#allocation7], 4
          %s158 = int_to_ptr.vmem [resolvable:$true] %s157
          %160 = dma.hbm_to_vmem [thread:$0]  %s2, 96, %s158, [#allocation6]
        $region20: #{tpu_custom_call.1} parent=11 // pred_fallthru
          _
      $region12: #{tpu_custom_call.1} parent=5 // pred_fallthru
        _
      %p161 = scmp.lt.s32.totalorder %s16, 2
      // Predicated region
      $region21: #{tpu_custom_call.1} parent=5 // pred_check
        %p162 = pneg %p161
      $region22: #{tpu_custom_call.1} parent=5 // pred_check_branch
        %164 = sbr.rel (%p162) target = $region24
      $region23: #{tpu_custom_call.1} parent=5 // pred_region
        // Predicated region
        $region25: #{tpu_custom_call.1} parent=23 // pred_check
          %p165 = pneg %p48
        $region26: #{tpu_custom_call.1} parent=23 // pred_check_branch
          %167 = sbr.rel (%p165) target = $region28
        $region27: #{tpu_custom_call.1} parent=23 // pred_region
          %s168 = sand.u32 %s38, 1
          %s169 = scalar_lea.sflag [#allocation3], %s168
          %s170 = sand.u32 %s38, 1
          %s171 = smul.addr %s170, 8
          %s172 = scalar_lea.vmem [#allocation2], %s171
          %s174 = ssub.s32 128, 128
          %175 = vsyncadd %s169, %s174
          %s176 = smul.addr %s23, 2
          %s177 = smul.addr %s176, 64
          %s178 = scalar_lea.hbm %s0, %s177
          %s180 = sshll.u32 %s172, 4
          %s181 = int_to_ptr.vmem [resolvable:$true] %s180
          %183 = dma.hbm_to_vmem [thread:$0]  %s178, 128, %s181, %s169
        $region28: #{tpu_custom_call.1} parent=23 // pred_fallthru
          _
      $region24: #{tpu_custom_call.1} parent=5 // pred_fallthru
        _
      %p184 = scmp.le.s32.totalorder 1, %s16
      %p185 = scmp.lt.s32.totalorder %s16, 3
      %p186 = pnand %p184, %p185
      %p187 = pneg %p186
      // Predicated region
      $region29: #{tpu_custom_call.1} parent=5 // pred_check
        _
      $region30: #{tpu_custom_call.1} parent=5 // pred_check_branch
        %189 = sbr.rel (%p186) target = $region32
      $region31: #{tpu_custom_call.1} parent=5 // pred_region
        %s190 = ssub.s32 %s16, 1
        %s191 = sand.u32 %s41, 1
        %s192 = scalar_lea.sflag [#allocation3], %s191
        %s193 = sand.u32 %s41, 1
        %s194 = smul.addr %s193, 8
        %s195 = scalar_lea.vmem [#allocation2], %s194
        // Predicated region
        $region33: #{tpu_custom_call.1} parent=31 // pred_check
          %p196 = pneg %p54
        $region34: #{tpu_custom_call.1} parent=31 // pred_check_branch
          %198 = sbr.rel (%p196) target = $region36
        $region35: #{tpu_custom_call.1} parent=31 // pred_region
          %199 = dma.done %s192, 128
        $region36: #{tpu_custom_call.1} parent=31 // pred_fallthru
          _
        // Predicated region
        $region37: #{tpu_custom_call.1} parent=31 // pred_check
          %p200 = pneg %p75
        $region38: #{tpu_custom_call.1} parent=31 // pred_check_branch
          %202 = sbr.rel (%p200) target = $region40
        $region39: #{tpu_custom_call.1} parent=31 // pred_region
          %203 = dma.done [#allocation6], 384
        $region40: #{tpu_custom_call.1} parent=31 // pred_fallthru
          _
        // Predicated region
        $region41: #{tpu_custom_call.1} parent=31 // pred_check
          %p204 = pneg %p96
        $region42: #{tpu_custom_call.1} parent=31 // pred_check_branch
          %206 = sbr.rel (%p204) target = $region44
        $region43: #{tpu_custom_call.1} parent=31 // pred_region
          %207 = dma.done [#allocation6], 96
        $region44: #{tpu_custom_call.1} parent=31 // pred_fallthru
          _
        %s208 = sand.u32 %s41, 1
        %s209 = scalar_lea.sflag [#allocation3], %s208
        %s210 = sand.u32 %s41, 1
        %s211 = smul.addr %s210, 8
        %s212 = scalar_lea.vmem [#allocation2], %s211
        %p213 = pneg %p54
        %p214 = pneg %p51
        %p215 = pneg %p75
        %p216 = pneg %p72
        %p217 = pneg %p96
        %p218 = pneg %p93
        %p219 = pneg %p124
        %p220 = pneg %p121
        %s221 = sand.u32 %s111, 1
        %s222 = scalar_lea.sflag [#allocation4], %s221
        %s223 = sand.u32 %s111, 1
        %s224 = smul.addr %s223, 1536
        %s225 = scalar_lea.vmem [#allocation8], %s224
        %s226 = smul.u32 32, %s26
        %v227 = vld [vmem:[%s195] sm:$0xff]
        %v228 = vld [vmem:[#allocation5] sm:$0xff]
        %v229 = vld [vmem:[#allocation5 + $0x8] sm:$0xff]
        %v230 = vld [vmem:[#allocation5 + $0x10] sm:$0xff]
        %v231 = vld [vmem:[#allocation7] sm:$0x3f]
        %v233 = vlaneseq
        %v234 = vshrl.u32 %v233, 7
        %v235 = vsub.s32 0, %v234
        %v236 = vrot.slane %v231, %v235
        %v237 = vlaneseq
        %v238 = vshrl.u32 %v237, 7
        %v239 = vsub.s32 1, %v238
        %v240 = vrot.slane %v231, %v239
        %v241 = vlaneseq
        %v242 = vshrl.u32 %v241, 7
        %v243 = vsub.s32 2, %v242
        %v244 = vrot.slane %v231, %v243
        %v245 = vlaneseq
        %v246 = vshrl.u32 %v245, 7
        %v247 = vsub.s32 3, %v246
        %v248 = vrot.slane %v231, %v247
        %v249 = vlaneseq
        %v250 = vshrl.u32 %v249, 7
        %v251 = vsub.s32 4, %v250
        %v252 = vrot.slane %v231, %v251
        %v253 = vlaneseq
        %v254 = vshrl.u32 %v253, 7
        %v255 = vsub.s32 5, %v254
        %v256 = vrot.slane %v231, %v255
        %v264 = vcombine.high %v227, %v227
        %266 = vxpose.xlu0.b32.start [1/16] %v227, 128
        %267 = vxpose.xlu0.b32.cont [2/16] 0.0, 128
        %268 = vxpose.xlu0.b32.cont [3/16] 0.0, 128
        %269 = vxpose.xlu0.b32.cont [4/16] 0.0, 128
        %270 = vxpose.xlu0.b32.cont [5/16] 0.0, 128
        %271 = vxpose.xlu0.b32.cont [6/16] 0.0, 128
        %272 = vxpose.xlu0.b32.cont [7/16] 0.0, 128
        %273 = vxpose.xlu0.b32.cont [8/16] 0.0, 128
        %274 = vxpose.xlu0.b32.cont [9/16] 0.0, 128
        %275 = vxpose.xlu0.b32.cont [10/16] 0.0, 128
        %276 = vxpose.xlu0.b32.cont [11/16] 0.0, 128
        %277 = vxpose.xlu0.b32.cont [12/16] 0.0, 128
        %278 = vxpose.xlu0.b32.cont [13/16] 0.0, 128
        %279 = vxpose.xlu0.b32.cont [14/16] 0.0, 128
        %280 = vxpose.xlu0.b32.cont [15/16] 0.0, 128
        %281 = vxpose.xlu0.b32.end [16/16] 0.0, 128
        %v282 = vpop.trf.xlu0
        %v283 = vpop.trf.xlu0
        %v284 = vpop.trf.xlu0
        %v285 = vpop.trf.xlu0
        %v286 = vpop.trf.xlu0
        %v287 = vpop.trf.xlu0
        %v288 = vpop.trf.xlu0
        %v289 = vpop.trf.xlu0
        %v290 = vpop.trf.xlu0
        %v291 = vpop.trf.xlu0
        %v292 = vpop.trf.xlu0
        %v293 = vpop.trf.xlu0
        %v294 = vpop.trf.xlu0
        %v295 = vpop.trf.xlu0
        %v296 = vpop.trf.xlu0
        %v297 = vpop.trf.xlu0
        %298 = vxpose.xlu0.b32.start [1/16] %v264, 128
        %299 = vxpose.xlu0.b32.cont [2/16] 0.0, 128
        %300 = vxpose.xlu0.b32.cont [3/16] 0.0, 128
        %301 = vxpose.xlu0.b32.cont [4/16] 0.0, 128
        %302 = vxpose.xlu0.b32.cont [5/16] 0.0, 128
        %303 = vxpose.xlu0.b32.cont [6/16] 0.0, 128
        %304 = vxpose.xlu0.b32.cont [7/16] 0.0, 128
        %305 = vxpose.xlu0.b32.cont [8/16] 0.0, 128
        %306 = vxpose.xlu0.b32.cont [9/16] 0.0, 128
        %307 = vxpose.xlu0.b32.cont [10/16] 0.0, 128
        %308 = vxpose.xlu0.b32.cont [11/16] 0.0, 128
        %309 = vxpose.xlu0.b32.cont [12/16] 0.0, 128
        %310 = vxpose.xlu0.b32.cont [13/16] 0.0, 128
        %311 = vxpose.xlu0.b32.cont [14/16] 0.0, 128
        %312 = vxpose.xlu0.b32.cont [15/16] 0.0, 128
        %313 = vxpose.xlu0.b32.end [16/16] 0.0, 128
        %v314 = vpop.trf.xlu0
        %v315 = vpop.trf.xlu0
        %v316 = vpop.trf.xlu0
        %v317 = vpop.trf.xlu0
        %v318 = vpop.trf.xlu0
        %v319 = vpop.trf.xlu0
        %v320 = vpop.trf.xlu0
        %v321 = vpop.trf.xlu0
        %v322 = vpop.trf.xlu0
        %v323 = vpop.trf.xlu0
        %v324 = vpop.trf.xlu0
        %v325 = vpop.trf.xlu0
        %v326 = vpop.trf.xlu0
        %v327 = vpop.trf.xlu0
        %v328 = vpop.trf.xlu0
        %v329 = vpop.trf.xlu0
        %v333 = vcombine.high %v228, %v228
        %v334 = vcombine.high %v229, %v229
        %v335 = vcombine.high %v230, %v230
        %vm336 = vcmask 31744
        %v338 = vsel %vm336, %v282, 0
        %v341 = vsel %vm336, %v283, 0
        %v344 = vsel %vm336, %v284, 0
        %v347 = vsel %vm336, %v285, 0
        %v350 = vsel %vm336, %v286, 0
        %v353 = vsel %vm336, %v287, 0
        %v356 = vsel %vm336, %v288, 0
        %v359 = vsel %vm336, %v289, 0
        %v362 = vsel %vm336, %v290, 0
        %v365 = vsel %vm336, %v291, 0
        %v368 = vsel %vm336, %v292, 0
        %v371 = vsel %vm336, %v293, 0
        %v374 = vsel %vm336, %v294, 0
        %v377 = vsel %vm336, %v295, 0
        %v380 = vsel %vm336, %v296, 0
        %v383 = vsel %vm336, %v297, 0
        %v386 = vsel %vm336, %v314, 0
        %v389 = vsel %vm336, %v315, 0
        %v392 = vsel %vm336, %v316, 0
        %v395 = vsel %vm336, %v317, 0
        %v398 = vsel %vm336, %v318, 0
        %v401 = vsel %vm336, %v319, 0
        %v404 = vsel %vm336, %v320, 0
        %v407 = vsel %vm336, %v321, 0
        %v410 = vsel %vm336, %v322, 0
        %v413 = vsel %vm336, %v323, 0
        %v416 = vsel %vm336, %v324, 0
        %v419 = vsel %vm336, %v325, 0
        %v422 = vsel %vm336, %v326, 0
        %v425 = vsel %vm336, %v327, 0
        %v428 = vsel %vm336, %v328, 0
        %v431 = vsel %vm336, %v329, 0
        %vm433 = vcmask 1043456
        %v434 = vsel %vm433, %v228, 0
        %v436 = vsel %vm433, %v333, 0
        %v438 = vsel %vm433, %v229, 0
        %v440 = vsel %vm433, %v334, 0
        %v442 = vsel %vm433, %v230, 0
        %v444 = vsel %vm433, %v335, 0
        %446 = vmatprep.subr.mxu0 0.0
        %447 = vmatpush1.msra.mxu0 0.0
        %448 = vmatprep.subr.mxu0 0.0
        %449 = vmatpush1.msra.mxu0 0.0
        %450 = vmatprep.subr.mxu0 0.0
        %451 = vmatpush1.msra.mxu0 0.0
        %452 = vmatprep.subr.mxu0 0.0
        %453 = vmatpush1.msra.mxu0 0.0
        %454 = vmatprep.subr.mxu0 0.0
        %455 = vmatpush1.msra.mxu0 0.0
        %456 = vmatprep.subr.mxu0 0.0
        %457 = vmatpush1.msra.mxu0 0.0
        %458 = vmatprep.subr.mxu0 0.0
        %459 = vmatpush1.msra.mxu0 0.0
        %460 = vmatprep.subr.mxu0 0.0
        %461 = vmatpush1.msra.mxu0 0.0
        %462 = vmatprep.subr.mxu0 0.0
        %463 = vmatpush1.msra.mxu0 0.0
        %464 = vmatprep.subr.mxu0 0.0
        %465 = vmatpush1.msra.mxu0 0.0
        %466 = vmatprep.subr.mxu0 0.0
        %467 = vmatpush1.msra.mxu0 0.0
        %468 = vmatprep.subr.mxu0 0.0
        %469 = vmatpush1.msra.mxu0 0.0
        %470 = vmatprep.subr.mxu0 0.0
        %471 = vmatpush1.msra.mxu0 0.0
        %472 = vmatprep.subr.mxu0 0.0
        %473 = vmatpush1.msra.mxu0 0.0
        %474 = vmatprep.subr.mxu0 0.0
        %475 = vmatpush1.msra.mxu0 0.0
        %476 = vmatprep.subr.mxu0 %v436
        %477 = vmatpush1.msra.mxu0 %v434
        %478 = vmatprep.subr.mxu0 0.0
        %479 = vmatpush2.msra.mxu0 0.0
        %480 = vmatprep.subr.mxu0 0.0
        %481 = vmatpush2.msra.mxu0 0.0
        %482 = vmatprep.subr.mxu0 0.0
        %483 = vmatpush2.msra.mxu0 0.0
        %484 = vmatprep.subr.mxu0 0.0
        %485 = vmatpush2.msra.mxu0 0.0
        %486 = vmatprep.subr.mxu0 0.0
        %487 = vmatpush2.msra.mxu0 0.0
        %488 = vmatprep.subr.mxu0 0.0
        %489 = vmatpush2.msra.mxu0 0.0
        %490 = vmatprep.subr.mxu0 0.0
        %491 = vmatpush2.msra.mxu0 0.0
        %492 = vmatprep.subr.mxu0 0.0
        %493 = vmatpush2.msra.mxu0 0.0
        %494 = vmatprep.subr.mxu0 0.0
        %495 = vmatpush2.msra.mxu0 0.0
        %496 = vmatprep.subr.mxu0 0.0
        %497 = vmatpush2.msra.mxu0 0.0
        %498 = vmatprep.subr.mxu0 0.0
        %499 = vmatpush2.msra.mxu0 0.0
        %500 = vmatprep.subr.mxu0 0.0
        %501 = vmatpush2.msra.mxu0 0.0
        %502 = vmatprep.subr.mxu0 0.0
        %503 = vmatpush2.msra.mxu0 0.0
        %504 = vmatprep.subr.mxu0 0.0
        %505 = vmatpush2.msra.mxu0 0.0
        %506 = vmatprep.subr.mxu0 0.0
        %507 = vmatpush2.msra.mxu0 0.0
        %508 = vmatprep.subr.mxu0 0.0
        %509 = vmatpush2.msra.mxu0 0.0
        %510 = vmatprep.mubr.f32.mxu0 0.0
        %511 = vmatmul.mubr.f32.gmra.mxu0 %v338
        %v512 = vpop.f32.mrf.mxu0
        %v513 = vadd.f32 %v236, %v512
        %v514 = vpop.f32.mrf.mxu0
        %v515 = vadd.f32 %v240, %v514
        %516 = vmatprep.mubr.f32.mxu0 0.0
        %517 = vmatmul.mubr.f32.gmra.mxu0 %v341
        %v518 = vpop.f32.mrf.mxu0
        %v519 = vadd.f32 %v236, %v518
        %v520 = vpop.f32.mrf.mxu0
        %v521 = vadd.f32 %v240, %v520
        %522 = vmatprep.mubr.f32.mxu0 0.0
        %523 = vmatmul.mubr.f32.gmra.mxu0 %v344
        %v524 = vpop.f32.mrf.mxu0
        %v525 = vadd.f32 %v236, %v524
        %v526 = vpop.f32.mrf.mxu0
        %v527 = vadd.f32 %v240, %v526
        %528 = vmatprep.mubr.f32.mxu0 0.0
        %529 = vmatmul.mubr.f32.gmra.mxu0 %v347
        %v530 = vpop.f32.mrf.mxu0
        %v531 = vadd.f32 %v236, %v530
        %v532 = vpop.f32.mrf.mxu0
        %v533 = vadd.f32 %v240, %v532
        %534 = vmatprep.mubr.f32.mxu0 0.0
        %535 = vmatmul.mubr.f32.gmra.mxu0 %v350
        %v536 = vpop.f32.mrf.mxu0
        %v537 = vadd.f32 %v236, %v536
        %v538 = vpop.f32.mrf.mxu0
        %v539 = vadd.f32 %v240, %v538
        %540 = vmatprep.mubr.f32.mxu0 0.0
        %541 = vmatmul.mubr.f32.gmra.mxu0 %v353
        %v542 = vpop.f32.mrf.mxu0
        %v543 = vadd.f32 %v236, %v542
        %v544 = vpop.f32.mrf.mxu0
        %v545 = vadd.f32 %v240, %v544
        %546 = vmatprep.mubr.f32.mxu0 0.0
        %547 = vmatmul.mubr.f32.gmra.mxu0 %v356
        %v548 = vpop.f32.mrf.mxu0
        %v549 = vadd.f32 %v236, %v548
        %v550 = vpop.f32.mrf.mxu0
        %v551 = vadd.f32 %v240, %v550
        %552 = vmatprep.mubr.f32.mxu0 0.0
        %553 = vmatmul.mubr.f32.gmra.mxu0 %v359
        %v554 = vpop.f32.mrf.mxu0
        %v555 = vadd.f32 %v236, %v554
        %v556 = vpop.f32.mrf.mxu0
        %v557 = vadd.f32 %v240, %v556
        %558 = vmatprep.mubr.f32.mxu0 0.0
        %559 = vmatmul.mubr.f32.gmra.mxu0 %v362
        %v560 = vpop.f32.mrf.mxu0
        %v561 = vadd.f32 %v236, %v560
        %v562 = vpop.f32.mrf.mxu0
        %v563 = vadd.f32 %v240, %v562
        %564 = vmatprep.mubr.f32.mxu0 0.0
        %565 = vmatmul.mubr.f32.gmra.mxu0 %v365
        %v566 = vpop.f32.mrf.mxu0
        %v567 = vadd.f32 %v236, %v566
        %v568 = vpop.f32.mrf.mxu0
        %v569 = vadd.f32 %v240, %v568
        %570 = vmatprep.mubr.f32.mxu0 0.0
        %571 = vmatmul.mubr.f32.gmra.mxu0 %v368
        %v572 = vpop.f32.mrf.mxu0
        %v573 = vadd.f32 %v236, %v572
        %v574 = vpop.f32.mrf.mxu0
        %v575 = vadd.f32 %v240, %v574
        %576 = vmatprep.mubr.f32.mxu0 0.0
        %577 = vmatmul.mubr.f32.gmra.mxu0 %v371
        %v578 = vpop.f32.mrf.mxu0
        %v579 = vadd.f32 %v236, %v578
        %v580 = vpop.f32.mrf.mxu0
        %v581 = vadd.f32 %v240, %v580
        %582 = vmatprep.mubr.f32.mxu0 0.0
        %583 = vmatmul.mubr.f32.gmra.mxu0 %v374
        %v584 = vpop.f32.mrf.mxu0
        %v585 = vadd.f32 %v236, %v584
        %v586 = vpop.f32.mrf.mxu0
        %v587 = vadd.f32 %v240, %v586
        %588 = vmatprep.mubr.f32.mxu0 0.0
        %589 = vmatmul.mubr.f32.gmra.mxu0 %v377
        %v590 = vpop.f32.mrf.mxu0
        %v591 = vadd.f32 %v236, %v590
        %v592 = vpop.f32.mrf.mxu0
        %v593 = vadd.f32 %v240, %v592
        %594 = vmatprep.mubr.f32.mxu0 0.0
        %595 = vmatmul.mubr.f32.gmra.mxu0 %v380
        %v596 = vpop.f32.mrf.mxu0
        %v597 = vadd.f32 %v236, %v596
        %v598 = vpop.f32.mrf.mxu0
        %v599 = vadd.f32 %v240, %v598
        %600 = vmatprep.mubr.f32.mxu0 0.0
        %601 = vmatmul.mubr.f32.gmra.mxu0 %v383
        %v602 = vpop.f32.mrf.mxu0
        %v603 = vadd.f32 %v236, %v602
        %v604 = vpop.f32.mrf.mxu0
        %v605 = vadd.f32 %v240, %v604
        %606 = vmatprep.mubr.f32.mxu0 0.0
        %607 = vmatmul.mubr.f32.gmra.mxu0 %v386
        %v608 = vpop.f32.mrf.mxu0
        %v609 = vadd.f32 %v236, %v608
        %v610 = vpop.f32.mrf.mxu0
        %v611 = vadd.f32 %v240, %v610
        %612 = vmatprep.mubr.f32.mxu0 0.0
        %613 = vmatmul.mubr.f32.gmra.mxu0 %v389
        %v614 = vpop.f32.mrf.mxu0
        %v615 = vadd.f32 %v236, %v614
        %v616 = vpop.f32.mrf.mxu0
        %v617 = vadd.f32 %v240, %v616
        %618 = vmatprep.mubr.f32.mxu0 0.0
        %619 = vmatmul.mubr.f32.gmra.mxu0 %v392
        %v620 = vpop.f32.mrf.mxu0
        %v621 = vadd.f32 %v236, %v620
        %v622 = vpop.f32.mrf.mxu0
        %v623 = vadd.f32 %v240, %v622
        %624 = vmatprep.mubr.f32.mxu0 0.0
        %625 = vmatmul.mubr.f32.gmra.mxu0 %v395
        %v626 = vpop.f32.mrf.mxu0
        %v627 = vadd.f32 %v236, %v626
        %v628 = vpop.f32.mrf.mxu0
        %v629 = vadd.f32 %v240, %v628
        %630 = vmatprep.mubr.f32.mxu0 0.0
        %631 = vmatmul.mubr.f32.gmra.mxu0 %v398
        %v632 = vpop.f32.mrf.mxu0
        %v633 = vadd.f32 %v236, %v632
        %v634 = vpop.f32.mrf.mxu0
        %v635 = vadd.f32 %v240, %v634
        %636 = vmatprep.mubr.f32.mxu0 0.0
        %637 = vmatmul.mubr.f32.gmra.mxu0 %v401
        %v638 = vpop.f32.mrf.mxu0
        %v639 = vadd.f32 %v236, %v638
        %v640 = vpop.f32.mrf.mxu0
        %v641 = vadd.f32 %v240, %v640
        %642 = vmatprep.mubr.f32.mxu0 0.0
        %643 = vmatmul.mubr.f32.gmra.mxu0 %v404
        %v644 = vpop.f32.mrf.mxu0
        %v645 = vadd.f32 %v236, %v644
        %v646 = vpop.f32.mrf.mxu0
        %v647 = vadd.f32 %v240, %v646
        %648 = vmatprep.mubr.f32.mxu0 0.0
        %649 = vmatmul.mubr.f32.gmra.mxu0 %v407
        %v650 = vpop.f32.mrf.mxu0
        %v651 = vadd.f32 %v236, %v650
        %v652 = vpop.f32.mrf.mxu0
        %v653 = vadd.f32 %v240, %v652
        %654 = vmatprep.mubr.f32.mxu0 0.0
        %655 = vmatmul.mubr.f32.gmra.mxu0 %v410
        %v656 = vpop.f32.mrf.mxu0
        %v657 = vadd.f32 %v236, %v656
        %v658 = vpop.f32.mrf.mxu0
        %v659 = vadd.f32 %v240, %v658
        %660 = vmatprep.mubr.f32.mxu0 0.0
        %661 = vmatmul.mubr.f32.gmra.mxu0 %v413
        %v662 = vpop.f32.mrf.mxu0
        %v663 = vadd.f32 %v236, %v662
        %v664 = vpop.f32.mrf.mxu0
        %v665 = vadd.f32 %v240, %v664
        %666 = vmatprep.mubr.f32.mxu0 0.0
        %667 = vmatmul.mubr.f32.gmra.mxu0 %v416
        %v668 = vpop.f32.mrf.mxu0
        %v669 = vadd.f32 %v236, %v668
        %v670 = vpop.f32.mrf.mxu0
        %v671 = vadd.f32 %v240, %v670
        %672 = vmatprep.mubr.f32.mxu0 0.0
        %673 = vmatmul.mubr.f32.gmra.mxu0 %v419
        %v674 = vpop.f32.mrf.mxu0
        %v675 = vadd.f32 %v236, %v674
        %v676 = vpop.f32.mrf.mxu0
        %v677 = vadd.f32 %v240, %v676
        %678 = vmatprep.mubr.f32.mxu0 0.0
        %679 = vmatmul.mubr.f32.gmra.mxu0 %v422
        %v680 = vpop.f32.mrf.mxu0
        %v681 = vadd.f32 %v236, %v680
        %v682 = vpop.f32.mrf.mxu0
        %v683 = vadd.f32 %v240, %v682
        %684 = vmatprep.mubr.f32.mxu0 0.0
        %685 = vmatmul.mubr.f32.gmra.mxu0 %v425
        %v686 = vpop.f32.mrf.mxu0
        %v687 = vadd.f32 %v236, %v686
        %v688 = vpop.f32.mrf.mxu0
        %v689 = vadd.f32 %v240, %v688
        %690 = vmatprep.mubr.f32.mxu0 0.0
        %691 = vmatmul.mubr.f32.gmra.mxu0 %v428
        %v692 = vpop.f32.mrf.mxu0
        %v693 = vadd.f32 %v236, %v692
        %v694 = vpop.f32.mrf.mxu0
        %v695 = vadd.f32 %v240, %v694
        %696 = vmatprep.mubr.f32.mxu0 0.0
        %697 = vmatmul.mubr.f32.gmra.mxu0 %v431
        %v698 = vpop.f32.mrf.mxu0
        %v699 = vadd.f32 %v236, %v698
        %v700 = vpop.f32.mrf.mxu0
        %v701 = vadd.f32 %v240, %v700
        %702 = vdwg.mxu0
        %703 = vmatprep.subr.mxu0 0.0
        %704 = vmatpush1.msra.mxu0 0.0
        %705 = vmatprep.subr.mxu0 0.0
        %706 = vmatpush1.msra.mxu0 0.0
        %707 = vmatprep.subr.mxu0 0.0
        %708 = vmatpush1.msra.mxu0 0.0
        %709 = vmatprep.subr.mxu0 0.0
        %710 = vmatpush1.msra.mxu0 0.0
        %711 = vmatprep.subr.mxu0 0.0
        %712 = vmatpush1.msra.mxu0 0.0
        %713 = vmatprep.subr.mxu0 0.0
        %714 = vmatpush1.msra.mxu0 0.0
        %715 = vmatprep.subr.mxu0 0.0
        %716 = vmatpush1.msra.mxu0 0.0
        %717 = vmatprep.subr.mxu0 0.0
        %718 = vmatpush1.msra.mxu0 0.0
        %719 = vmatprep.subr.mxu0 0.0
        %720 = vmatpush1.msra.mxu0 0.0
        %721 = vmatprep.subr.mxu0 0.0
        %722 = vmatpush1.msra.mxu0 0.0
        %723 = vmatprep.subr.mxu0 0.0
        %724 = vmatpush1.msra.mxu0 0.0
        %725 = vmatprep.subr.mxu0 0.0
        %726 = vmatpush1.msra.mxu0 0.0
        %727 = vmatprep.subr.mxu0 0.0
        %728 = vmatpush1.msra.mxu0 0.0
        %729 = vmatprep.subr.mxu0 0.0
        %730 = vmatpush1.msra.mxu0 0.0
        %731 = vmatprep.subr.mxu0 0.0
        %732 = vmatpush1.msra.mxu0 0.0
        %733 = vmatprep.subr.mxu0 %v440
        %734 = vmatpush1.msra.mxu0 %v438
        %735 = vmatprep.subr.mxu0 0.0
        %736 = vmatpush2.msra.mxu0 0.0
        %737 = vmatprep.subr.mxu0 0.0
        %738 = vmatpush2.msra.mxu0 0.0
        %739 = vmatprep.subr.mxu0 0.0
        %740 = vmatpush2.msra.mxu0 0.0
        %741 = vmatprep.subr.mxu0 0.0
        %742 = vmatpush2.msra.mxu0 0.0
        %743 = vmatprep.subr.mxu0 0.0
        %744 = vmatpush2.msra.mxu0 0.0
        %745 = vmatprep.subr.mxu0 0.0
        %746 = vmatpush2.msra.mxu0 0.0
        %747 = vmatprep.subr.mxu0 0.0
        %748 = vmatpush2.msra.mxu0 0.0
        %749 = vmatprep.subr.mxu0 0.0
        %750 = vmatpush2.msra.mxu0 0.0
        %751 = vmatprep.subr.mxu0 0.0
        %752 = vmatpush2.msra.mxu0 0.0
        %753 = vmatprep.subr.mxu0 0.0
        %754 = vmatpush2.msra.mxu0 0.0
        %755 = vmatprep.subr.mxu0 0.0
        %756 = vmatpush2.msra.mxu0 0.0
        %757 = vmatprep.subr.mxu0 0.0
        %758 = vmatpush2.msra.mxu0 0.0
        %759 = vmatprep.subr.mxu0 0.0
        %760 = vmatpush2.msra.mxu0 0.0
        %761 = vmatprep.subr.mxu0 0.0
        %762 = vmatpush2.msra.mxu0 0.0
        %763 = vmatprep.subr.mxu0 0.0
        %764 = vmatpush2.msra.mxu0 0.0
        %765 = vmatprep.subr.mxu0 0.0
        %766 = vmatpush2.msra.mxu0 0.0
        %767 = vmatprep.mubr.f32.mxu0 0.0
        %768 = vmatmul.mubr.f32.gmra.mxu0 %v338
        %v769 = vpop.f32.mrf.mxu0
        %v770 = vadd.f32 %v244, %v769
        %v771 = vpop.f32.mrf.mxu0
        %v772 = vadd.f32 %v248, %v771
        %773 = vmatprep.mubr.f32.mxu0 0.0
        %774 = vmatmul.mubr.f32.gmra.mxu0 %v341
        %v775 = vpop.f32.mrf.mxu0
        %v776 = vadd.f32 %v244, %v775
        %v777 = vpop.f32.mrf.mxu0
        %v778 = vadd.f32 %v248, %v777
        %779 = vmatprep.mubr.f32.mxu0 0.0
        %780 = vmatmul.mubr.f32.gmra.mxu0 %v344
        %v781 = vpop.f32.mrf.mxu0
        %v782 = vadd.f32 %v244, %v781
        %v783 = vpop.f32.mrf.mxu0
        %v784 = vadd.f32 %v248, %v783
        %785 = vmatprep.mubr.f32.mxu0 0.0
        %786 = vmatmul.mubr.f32.gmra.mxu0 %v347
        %v787 = vpop.f32.mrf.mxu0
        %v788 = vadd.f32 %v244, %v787
        %v789 = vpop.f32.mrf.mxu0
        %v790 = vadd.f32 %v248, %v789
        %791 = vmatprep.mubr.f32.mxu0 0.0
        %792 = vmatmul.mubr.f32.gmra.mxu0 %v350
        %v793 = vpop.f32.mrf.mxu0
        %v794 = vadd.f32 %v244, %v793
        %v795 = vpop.f32.mrf.mxu0
        %v796 = vadd.f32 %v248, %v795
        %797 = vmatprep.mubr.f32.mxu0 0.0
        %798 = vmatmul.mubr.f32.gmra.mxu0 %v353
        %v799 = vpop.f32.mrf.mxu0
        %v800 = vadd.f32 %v244, %v799
        %v801 = vpop.f32.mrf.mxu0
        %v802 = vadd.f32 %v248, %v801
        %803 = vmatprep.mubr.f32.mxu0 0.0
        %804 = vmatmul.mubr.f32.gmra.mxu0 %v356
        %v805 = vpop.f32.mrf.mxu0
        %v806 = vadd.f32 %v244, %v805
        %v807 = vpop.f32.mrf.mxu0
        %v808 = vadd.f32 %v248, %v807
        %809 = vmatprep.mubr.f32.mxu0 0.0
        %810 = vmatmul.mubr.f32.gmra.mxu0 %v359
        %v811 = vpop.f32.mrf.mxu0
        %v812 = vadd.f32 %v244, %v811
        %v813 = vpop.f32.mrf.mxu0
        %v814 = vadd.f32 %v248, %v813
        %815 = vmatprep.mubr.f32.mxu0 0.0
        %816 = vmatmul.mubr.f32.gmra.mxu0 %v362
        %v817 = vpop.f32.mrf.mxu0
        %v818 = vadd.f32 %v244, %v817
        %v819 = vpop.f32.mrf.mxu0
        %v820 = vadd.f32 %v248, %v819
        %821 = vmatprep.mubr.f32.mxu0 0.0
        %822 = vmatmul.mubr.f32.gmra.mxu0 %v365
        %v823 = vpop.f32.mrf.mxu0
        %v824 = vadd.f32 %v244, %v823
        %v825 = vpop.f32.mrf.mxu0
        %v826 = vadd.f32 %v248, %v825
        %827 = vmatprep.mubr.f32.mxu0 0.0
        %828 = vmatmul.mubr.f32.gmra.mxu0 %v368
        %v829 = vpop.f32.mrf.mxu0
        %v830 = vadd.f32 %v244, %v829
        %v831 = vpop.f32.mrf.mxu0
        %v832 = vadd.f32 %v248, %v831
        %833 = vmatprep.mubr.f32.mxu0 0.0
        %834 = vmatmul.mubr.f32.gmra.mxu0 %v371
        %v835 = vpop.f32.mrf.mxu0
        %v836 = vadd.f32 %v244, %v835
        %v837 = vpop.f32.mrf.mxu0
        %v838 = vadd.f32 %v248, %v837
        %839 = vmatprep.mubr.f32.mxu0 0.0
        %840 = vmatmul.mubr.f32.gmra.mxu0 %v374
        %v841 = vpop.f32.mrf.mxu0
        %v842 = vadd.f32 %v244, %v841
        %v843 = vpop.f32.mrf.mxu0
        %v844 = vadd.f32 %v248, %v843
        %845 = vmatprep.mubr.f32.mxu0 0.0
        %846 = vmatmul.mubr.f32.gmra.mxu0 %v377
        %v847 = vpop.f32.mrf.mxu0
        %v848 = vadd.f32 %v244, %v847
        %v849 = vpop.f32.mrf.mxu0
        %v850 = vadd.f32 %v248, %v849
        %851 = vmatprep.mubr.f32.mxu0 0.0
        %852 = vmatmul.mubr.f32.gmra.mxu0 %v380
        %v853 = vpop.f32.mrf.mxu0
        %v854 = vadd.f32 %v244, %v853
        %v855 = vpop.f32.mrf.mxu0
        %v856 = vadd.f32 %v248, %v855
        %857 = vmatprep.mubr.f32.mxu0 0.0
        %858 = vmatmul.mubr.f32.gmra.mxu0 %v383
        %v859 = vpop.f32.mrf.mxu0
        %v860 = vadd.f32 %v244, %v859
        %v861 = vpop.f32.mrf.mxu0
        %v862 = vadd.f32 %v248, %v861
        %863 = vmatprep.mubr.f32.mxu0 0.0
        %864 = vmatmul.mubr.f32.gmra.mxu0 %v386
        %v865 = vpop.f32.mrf.mxu0
        %v866 = vadd.f32 %v244, %v865
        %v867 = vpop.f32.mrf.mxu0
        %v868 = vadd.f32 %v248, %v867
        %869 = vmatprep.mubr.f32.mxu0 0.0
        %870 = vmatmul.mubr.f32.gmra.mxu0 %v389
        %v871 = vpop.f32.mrf.mxu0
        %v872 = vadd.f32 %v244, %v871
        %v873 = vpop.f32.mrf.mxu0
        %v874 = vadd.f32 %v248, %v873
        %875 = vmatprep.mubr.f32.mxu0 0.0
        %876 = vmatmul.mubr.f32.gmra.mxu0 %v392
        %v877 = vpop.f32.mrf.mxu0
        %v878 = vadd.f32 %v244, %v877
        %v879 = vpop.f32.mrf.mxu0
        %v880 = vadd.f32 %v248, %v879
        %881 = vmatprep.mubr.f32.mxu0 0.0
        %882 = vmatmul.mubr.f32.gmra.mxu0 %v395
        %v883 = vpop.f32.mrf.mxu0
        %v884 = vadd.f32 %v244, %v883
        %v885 = vpop.f32.mrf.mxu0
        %v886 = vadd.f32 %v248, %v885
        %887 = vmatprep.mubr.f32.mxu0 0.0
        %888 = vmatmul.mubr.f32.gmra.mxu0 %v398
        %v889 = vpop.f32.mrf.mxu0
        %v890 = vadd.f32 %v244, %v889
        %v891 = vpop.f32.mrf.mxu0
        %v892 = vadd.f32 %v248, %v891
        %893 = vmatprep.mubr.f32.mxu0 0.0
        %894 = vmatmul.mubr.f32.gmra.mxu0 %v401
        %v895 = vpop.f32.mrf.mxu0
        %v896 = vadd.f32 %v244, %v895
        %v897 = vpop.f32.mrf.mxu0
        %v898 = vadd.f32 %v248, %v897
        %899 = vmatprep.mubr.f32.mxu0 0.0
        %900 = vmatmul.mubr.f32.gmra.mxu0 %v404
        %v901 = vpop.f32.mrf.mxu0
        %v902 = vadd.f32 %v244, %v901
        %v903 = vpop.f32.mrf.mxu0
        %v904 = vadd.f32 %v248, %v903
        %905 = vmatprep.mubr.f32.mxu0 0.0
        %906 = vmatmul.mubr.f32.gmra.mxu0 %v407
        %v907 = vpop.f32.mrf.mxu0
        %v908 = vadd.f32 %v244, %v907
        %v909 = vpop.f32.mrf.mxu0
        %v910 = vadd.f32 %v248, %v909
        %911 = vmatprep.mubr.f32.mxu0 0.0
        %912 = vmatmul.mubr.f32.gmra.mxu0 %v410
        %v913 = vpop.f32.mrf.mxu0
        %v914 = vadd.f32 %v244, %v913
        %v915 = vpop.f32.mrf.mxu0
        %v916 = vadd.f32 %v248, %v915
        %917 = vmatprep.mubr.f32.mxu0 0.0
        %918 = vmatmul.mubr.f32.gmra.mxu0 %v413
        %v919 = vpop.f32.mrf.mxu0
        %v920 = vadd.f32 %v244, %v919
        %v921 = vpop.f32.mrf.mxu0
        %v922 = vadd.f32 %v248, %v921
        %923 = vmatprep.mubr.f32.mxu0 0.0
        %924 = vmatmul.mubr.f32.gmra.mxu0 %v416
        %v925 = vpop.f32.mrf.mxu0
        %v926 = vadd.f32 %v244, %v925
        %v927 = vpop.f32.mrf.mxu0
        %v928 = vadd.f32 %v248, %v927
        %929 = vmatprep.mubr.f32.mxu0 0.0
        %930 = vmatmul.mubr.f32.gmra.mxu0 %v419
        %v931 = vpop.f32.mrf.mxu0
        %v932 = vadd.f32 %v244, %v931
        %v933 = vpop.f32.mrf.mxu0
        %v934 = vadd.f32 %v248, %v933
        %935 = vmatprep.mubr.f32.mxu0 0.0
        %936 = vmatmul.mubr.f32.gmra.mxu0 %v422
        %v937 = vpop.f32.mrf.mxu0
        %v938 = vadd.f32 %v244, %v937
        %v939 = vpop.f32.mrf.mxu0
        %v940 = vadd.f32 %v248, %v939
        %941 = vmatprep.mubr.f32.mxu0 0.0
        %942 = vmatmul.mubr.f32.gmra.mxu0 %v425
        %v943 = vpop.f32.mrf.mxu0
        %v944 = vadd.f32 %v244, %v943
        %v945 = vpop.f32.mrf.mxu0
        %v946 = vadd.f32 %v248, %v945
        %947 = vmatprep.mubr.f32.mxu0 0.0
        %948 = vmatmul.mubr.f32.gmra.mxu0 %v428
        %v949 = vpop.f32.mrf.mxu0
        %v950 = vadd.f32 %v244, %v949
        %v951 = vpop.f32.mrf.mxu0
        %v952 = vadd.f32 %v248, %v951
        %953 = vmatprep.mubr.f32.mxu0 0.0
        %954 = vmatmul.mubr.f32.gmra.mxu0 %v431
        %v955 = vpop.f32.mrf.mxu0
        %v956 = vadd.f32 %v244, %v955
        %v957 = vpop.f32.mrf.mxu0
        %v958 = vadd.f32 %v248, %v957
        %959 = vdwg.mxu0
        %960 = vmatprep.subr.mxu0 0.0
        %961 = vmatpush1.msra.mxu0 0.0
        %962 = vmatprep.subr.mxu0 0.0
        %963 = vmatpush1.msra.mxu0 0.0
        %964 = vmatprep.subr.mxu0 0.0
        %965 = vmatpush1.msra.mxu0 0.0
        %966 = vmatprep.subr.mxu0 0.0
        %967 = vmatpush1.msra.mxu0 0.0
        %968 = vmatprep.subr.mxu0 0.0
        %969 = vmatpush1.msra.mxu0 0.0
        %970 = vmatprep.subr.mxu0 0.0
        %971 = vmatpush1.msra.mxu0 0.0
        %972 = vmatprep.subr.mxu0 0.0
        %973 = vmatpush1.msra.mxu0 0.0
        %974 = vmatprep.subr.mxu0 0.0
        %975 = vmatpush1.msra.mxu0 0.0
        %976 = vmatprep.subr.mxu0 0.0
        %977 = vmatpush1.msra.mxu0 0.0
        %978 = vmatprep.subr.mxu0 0.0
        %979 = vmatpush1.msra.mxu0 0.0
        %980 = vmatprep.subr.mxu0 0.0
        %981 = vmatpush1.msra.mxu0 0.0
        %982 = vmatprep.subr.mxu0 0.0
        %983 = vmatpush1.msra.mxu0 0.0
        %984 = vmatprep.subr.mxu0 0.0
        %985 = vmatpush1.msra.mxu0 0.0
        %986 = vmatprep.subr.mxu0 0.0
        %987 = vmatpush1.msra.mxu0 0.0
        %988 = vmatprep.subr.mxu0 0.0
        %989 = vmatpush1.msra.mxu0 0.0
        %990 = vmatprep.subr.mxu0 %v444
        %991 = vmatpush1.msra.mxu0 %v442
        %992 = vmatprep.subr.mxu0 0.0
        %993 = vmatpush2.msra.mxu0 0.0
        %994 = vmatprep.subr.mxu0 0.0
        %995 = vmatpush2.msra.mxu0 0.0
        %996 = vmatprep.subr.mxu0 0.0
        %997 = vmatpush2.msra.mxu0 0.0
        %998 = vmatprep.subr.mxu0 0.0
        %999 = vmatpush2.msra.mxu0 0.0
        %1000 = vmatprep.subr.mxu0 0.0
        %1001 = vmatpush2.msra.mxu0 0.0
        %1002 = vmatprep.subr.mxu0 0.0
        %1003 = vmatpush2.msra.mxu0 0.0
        %1004 = vmatprep.subr.mxu0 0.0
        %1005 = vmatpush2.msra.mxu0 0.0
        %1006 = vmatprep.subr.mxu0 0.0
        %1007 = vmatpush2.msra.mxu0 0.0
        %1008 = vmatprep.subr.mxu0 0.0
        %1009 = vmatpush2.msra.mxu0 0.0
        %1010 = vmatprep.subr.mxu0 0.0
        %1011 = vmatpush2.msra.mxu0 0.0
        %1012 = vmatprep.subr.mxu0 0.0
        %1013 = vmatpush2.msra.mxu0 0.0
        %1014 = vmatprep.subr.mxu0 0.0
        %1015 = vmatpush2.msra.mxu0 0.0
        %1016 = vmatprep.subr.mxu0 0.0
        %1017 = vmatpush2.msra.mxu0 0.0
        %1018 = vmatprep.subr.mxu0 0.0
        %1019 = vmatpush2.msra.mxu0 0.0
        %1020 = vmatprep.subr.mxu0 0.0
        %1021 = vmatpush2.msra.mxu0 0.0
        %1022 = vmatprep.subr.mxu0 0.0
        %1023 = vmatpush2.msra.mxu0 0.0
        %1024 = vmatprep.mubr.f32.mxu0 0.0
        %1025 = vmatmul.mubr.f32.gmra.mxu0 %v338
        %v1026 = vpop.f32.mrf.mxu0
        %v1027 = vadd.f32 %v252, %v1026
        %v1028 = vpop.f32.mrf.mxu0
        %v1029 = vadd.f32 %v256, %v1028
        %1030 = vmatprep.mubr.f32.mxu0 0.0
        %1031 = vmatmul.mubr.f32.gmra.mxu0 %v341
        %v1032 = vpop.f32.mrf.mxu0
        %v1033 = vadd.f32 %v252, %v1032
        %v1034 = vpop.f32.mrf.mxu0
        %v1035 = vadd.f32 %v256, %v1034
        %1036 = vmatprep.mubr.f32.mxu0 0.0
        %1037 = vmatmul.mubr.f32.gmra.mxu0 %v344
        %v1038 = vpop.f32.mrf.mxu0
        %v1039 = vadd.f32 %v252, %v1038
        %v1040 = vpop.f32.mrf.mxu0
        %v1041 = vadd.f32 %v256, %v1040
        %1042 = vmatprep.mubr.f32.mxu0 0.0
        %1043 = vmatmul.mubr.f32.gmra.mxu0 %v347
        %v1044 = vpop.f32.mrf.mxu0
        %v1045 = vadd.f32 %v252, %v1044
        %v1046 = vpop.f32.mrf.mxu0
        %v1047 = vadd.f32 %v256, %v1046
        %1048 = vmatprep.mubr.f32.mxu0 0.0
        %1049 = vmatmul.mubr.f32.gmra.mxu0 %v350
        %v1050 = vpop.f32.mrf.mxu0
        %v1051 = vadd.f32 %v252, %v1050
        %v1052 = vpop.f32.mrf.mxu0
        %v1053 = vadd.f32 %v256, %v1052
        %1054 = vmatprep.mubr.f32.mxu0 0.0
        %1055 = vmatmul.mubr.f32.gmra.mxu0 %v353
        %v1056 = vpop.f32.mrf.mxu0
        %v1057 = vadd.f32 %v252, %v1056
        %v1058 = vpop.f32.mrf.mxu0
        %v1059 = vadd.f32 %v256, %v1058
        %1060 = vmatprep.mubr.f32.mxu0 0.0
        %1061 = vmatmul.mubr.f32.gmra.mxu0 %v356
        %v1062 = vpop.f32.mrf.mxu0
        %v1063 = vadd.f32 %v252, %v1062
        %v1064 = vpop.f32.mrf.mxu0
        %v1065 = vadd.f32 %v256, %v1064
        %1066 = vmatprep.mubr.f32.mxu0 0.0
        %1067 = vmatmul.mubr.f32.gmra.mxu0 %v359
        %v1068 = vpop.f32.mrf.mxu0
        %v1069 = vadd.f32 %v252, %v1068
        %v1070 = vpop.f32.mrf.mxu0
        %v1071 = vadd.f32 %v256, %v1070
        %1072 = vmatprep.mubr.f32.mxu0 0.0
        %1073 = vmatmul.mubr.f32.gmra.mxu0 %v362
        %v1074 = vpop.f32.mrf.mxu0
        %v1075 = vadd.f32 %v252, %v1074
        %v1076 = vpop.f32.mrf.mxu0
        %v1077 = vadd.f32 %v256, %v1076
        %1078 = vmatprep.mubr.f32.mxu0 0.0
        %1079 = vmatmul.mubr.f32.gmra.mxu0 %v365
        %v1080 = vpop.f32.mrf.mxu0
        %v1081 = vadd.f32 %v252, %v1080
        %v1082 = vpop.f32.mrf.mxu0
        %v1083 = vadd.f32 %v256, %v1082
        %1084 = vmatprep.mubr.f32.mxu0 0.0
        %1085 = vmatmul.mubr.f32.gmra.mxu0 %v368
        %v1086 = vpop.f32.mrf.mxu0
        %v1087 = vadd.f32 %v252, %v1086
        %v1088 = vpop.f32.mrf.mxu0
        %v1089 = vadd.f32 %v256, %v1088
        %1090 = vmatprep.mubr.f32.mxu0 0.0
        %1091 = vmatmul.mubr.f32.gmra.mxu0 %v371
        %v1092 = vpop.f32.mrf.mxu0
        %v1093 = vadd.f32 %v252, %v1092
        %v1094 = vpop.f32.mrf.mxu0
        %v1095 = vadd.f32 %v256, %v1094
        %1096 = vmatprep.mubr.f32.mxu0 0.0
        %1097 = vmatmul.mubr.f32.gmra.mxu0 %v374
        %v1098 = vpop.f32.mrf.mxu0
        %v1099 = vadd.f32 %v252, %v1098
        %v1100 = vpop.f32.mrf.mxu0
        %v1101 = vadd.f32 %v256, %v1100
        %1102 = vmatprep.mubr.f32.mxu0 0.0
        %1103 = vmatmul.mubr.f32.gmra.mxu0 %v377
        %v1104 = vpop.f32.mrf.mxu0
        %v1105 = vadd.f32 %v252, %v1104
        %v1106 = vpop.f32.mrf.mxu0
        %v1107 = vadd.f32 %v256, %v1106
        %1108 = vmatprep.mubr.f32.mxu0 0.0
        %1109 = vmatmul.mubr.f32.gmra.mxu0 %v380
        %v1110 = vpop.f32.mrf.mxu0
        %v1111 = vadd.f32 %v252, %v1110
        %v1112 = vpop.f32.mrf.mxu0
        %v1113 = vadd.f32 %v256, %v1112
        %1114 = vmatprep.mubr.f32.mxu0 0.0
        %1115 = vmatmul.mubr.f32.gmra.mxu0 %v383
        %v1116 = vpop.f32.mrf.mxu0
        %v1117 = vadd.f32 %v252, %v1116
        %v1118 = vpop.f32.mrf.mxu0
        %v1119 = vadd.f32 %v256, %v1118
        %1120 = vmatprep.mubr.f32.mxu0 0.0
        %1121 = vmatmul.mubr.f32.gmra.mxu0 %v386
        %v1122 = vpop.f32.mrf.mxu0
        %v1123 = vadd.f32 %v252, %v1122
        %v1124 = vpop.f32.mrf.mxu0
        %v1125 = vadd.f32 %v256, %v1124
        %1126 = vmatprep.mubr.f32.mxu0 0.0
        %1127 = vmatmul.mubr.f32.gmra.mxu0 %v389
        %v1128 = vpop.f32.mrf.mxu0
        %v1129 = vadd.f32 %v252, %v1128
        %v1130 = vpop.f32.mrf.mxu0
        %v1131 = vadd.f32 %v256, %v1130
        %1132 = vmatprep.mubr.f32.mxu0 0.0
        %1133 = vmatmul.mubr.f32.gmra.mxu0 %v392
        %v1134 = vpop.f32.mrf.mxu0
        %v1135 = vadd.f32 %v252, %v1134
        %v1136 = vpop.f32.mrf.mxu0
        %v1137 = vadd.f32 %v256, %v1136
        %1138 = vmatprep.mubr.f32.mxu0 0.0
        %1139 = vmatmul.mubr.f32.gmra.mxu0 %v395
        %v1140 = vpop.f32.mrf.mxu0
        %v1141 = vadd.f32 %v252, %v1140
        %v1142 = vpop.f32.mrf.mxu0
        %v1143 = vadd.f32 %v256, %v1142
        %1144 = vmatprep.mubr.f32.mxu0 0.0
        %1145 = vmatmul.mubr.f32.gmra.mxu0 %v398
        %v1146 = vpop.f32.mrf.mxu0
        %v1147 = vadd.f32 %v252, %v1146
        %v1148 = vpop.f32.mrf.mxu0
        %v1149 = vadd.f32 %v256, %v1148
        %1150 = vmatprep.mubr.f32.mxu0 0.0
        %1151 = vmatmul.mubr.f32.gmra.mxu0 %v401
        %v1152 = vpop.f32.mrf.mxu0
        %v1153 = vadd.f32 %v252, %v1152
        %v1154 = vpop.f32.mrf.mxu0
        %v1155 = vadd.f32 %v256, %v1154
        %1156 = vmatprep.mubr.f32.mxu0 0.0
        %1157 = vmatmul.mubr.f32.gmra.mxu0 %v404
        %v1158 = vpop.f32.mrf.mxu0
        %v1159 = vadd.f32 %v252, %v1158
        %v1160 = vpop.f32.mrf.mxu0
        %v1161 = vadd.f32 %v256, %v1160
        %1162 = vmatprep.mubr.f32.mxu0 0.0
        %1163 = vmatmul.mubr.f32.gmra.mxu0 %v407
        %v1164 = vpop.f32.mrf.mxu0
        %v1165 = vadd.f32 %v252, %v1164
        %v1166 = vpop.f32.mrf.mxu0
        %v1167 = vadd.f32 %v256, %v1166
        %1168 = vmatprep.mubr.f32.mxu0 0.0
        %1169 = vmatmul.mubr.f32.gmra.mxu0 %v410
        %v1170 = vpop.f32.mrf.mxu0
        %v1171 = vadd.f32 %v252, %v1170
        %v1172 = vpop.f32.mrf.mxu0
        %v1173 = vadd.f32 %v256, %v1172
        %1174 = vmatprep.mubr.f32.mxu0 0.0
        %1175 = vmatmul.mubr.f32.gmra.mxu0 %v413
        %v1176 = vpop.f32.mrf.mxu0
        %v1177 = vadd.f32 %v252, %v1176
        %v1178 = vpop.f32.mrf.mxu0
        %v1179 = vadd.f32 %v256, %v1178
        %1180 = vmatprep.mubr.f32.mxu0 0.0
        %1181 = vmatmul.mubr.f32.gmra.mxu0 %v416
        %v1182 = vpop.f32.mrf.mxu0
        %v1183 = vadd.f32 %v252, %v1182
        %v1184 = vpop.f32.mrf.mxu0
        %v1185 = vadd.f32 %v256, %v1184
        %1186 = vmatprep.mubr.f32.mxu0 0.0
        %1187 = vmatmul.mubr.f32.gmra.mxu0 %v419
        %v1188 = vpop.f32.mrf.mxu0
        %v1189 = vadd.f32 %v252, %v1188
        %v1190 = vpop.f32.mrf.mxu0
        %v1191 = vadd.f32 %v256, %v1190
        %1192 = vmatprep.mubr.f32.mxu0 0.0
        %1193 = vmatmul.mubr.f32.gmra.mxu0 %v422
        %v1194 = vpop.f32.mrf.mxu0
        %v1195 = vadd.f32 %v252, %v1194
        %v1196 = vpop.f32.mrf.mxu0
        %v1197 = vadd.f32 %v256, %v1196
        %1198 = vmatprep.mubr.f32.mxu0 0.0
        %1199 = vmatmul.mubr.f32.gmra.mxu0 %v425
        %v1200 = vpop.f32.mrf.mxu0
        %v1201 = vadd.f32 %v252, %v1200
        %v1202 = vpop.f32.mrf.mxu0
        %v1203 = vadd.f32 %v256, %v1202
        %1204 = vmatprep.mubr.f32.mxu0 0.0
        %1205 = vmatmul.mubr.f32.gmra.mxu0 %v428
        %v1206 = vpop.f32.mrf.mxu0
        %v1207 = vadd.f32 %v252, %v1206
        %v1208 = vpop.f32.mrf.mxu0
        %v1209 = vadd.f32 %v256, %v1208
        %1210 = vmatprep.mubr.f32.mxu0 0.0
        %1211 = vmatmul.mubr.f32.gmra.mxu0 %v431
        %v1212 = vpop.f32.mrf.mxu0
        %v1213 = vadd.f32 %v252, %v1212
        %v1214 = vpop.f32.mrf.mxu0
        %v1215 = vadd.f32 %v256, %v1214
        %1216 = vdwg.mxu0
        %1217 = vst [vmem:[%s225] sm:$0xff] %v513
        %1218 = vst [vmem:[%s225 + $0x8] sm:$0xff] %v515
        %1219 = vst [vmem:[%s225 + $0x10] sm:$0xff] %v770
        %1220 = vst [vmem:[%s225 + $0x18] sm:$0xff] %v772
        %1221 = vst [vmem:[%s225 + $0x20] sm:$0xff] %v1027
        %1222 = vst [vmem:[%s225 + $0x28] sm:$0xff] %v1029
        %1223 = vst [vmem:[%s225 + $0x30] sm:$0xff] %v519
        %1224 = vst [vmem:[%s225 + $0x38] sm:$0xff] %v521
        %1225 = vst [vmem:[%s225 + $0x40] sm:$0xff] %v776
        %1226 = vst [vmem:[%s225 + $0x48] sm:$0xff] %v778
        %1227 = vst [vmem:[%s225 + $0x50] sm:$0xff] %v1033
        %1228 = vst [vmem:[%s225 + $0x58] sm:$0xff] %v1035
        %1229 = vst [vmem:[%s225 + $0x60] sm:$0xff] %v525
        %1230 = vst [vmem:[%s225 + $0x68] sm:$0xff] %v527
        %1231 = vst [vmem:[%s225 + $0x70] sm:$0xff] %v782
        %1232 = vst [vmem:[%s225 + $0x78] sm:$0xff] %v784
        %1233 = vst [vmem:[%s225 + $0x80] sm:$0xff] %v1039
        %1234 = vst [vmem:[%s225 + $0x88] sm:$0xff] %v1041
        %1235 = vst [vmem:[%s225 + $0x90] sm:$0xff] %v531
        %1236 = vst [vmem:[%s225 + $0x98] sm:$0xff] %v533
        %1237 = vst [vmem:[%s225 + $0xa0] sm:$0xff] %v788
        %1238 = vst [vmem:[%s225 + $0xa8] sm:$0xff] %v790
        %1239 = vst [vmem:[%s225 + $0xb0] sm:$0xff] %v1045
        %1240 = vst [vmem:[%s225 + $0xb8] sm:$0xff] %v1047
        %1241 = vst [vmem:[%s225 + $0xc0] sm:$0xff] %v537
        %1242 = vst [vmem:[%s225 + $0xc8] sm:$0xff] %v539
        %1243 = vst [vmem:[%s225 + $0xd0] sm:$0xff] %v794
        %1244 = vst [vmem:[%s225 + $0xd8] sm:$0xff] %v796
        %1245 = vst [vmem:[%s225 + $0xe0] sm:$0xff] %v1051
        %1246 = vst [vmem:[%s225 + $0xe8] sm:$0xff] %v1053
        %1247 = vst [vmem:[%s225 + $0xf0] sm:$0xff] %v543
        %1248 = vst [vmem:[%s225 + $0xf8] sm:$0xff] %v545
        %1249 = vst [vmem:[%s225 + $0x100] sm:$0xff] %v800
        %1250 = vst [vmem:[%s225 + $0x108] sm:$0xff] %v802
        %1251 = vst [vmem:[%s225 + $0x110] sm:$0xff] %v1057
        %1252 = vst [vmem:[%s225 + $0x118] sm:$0xff] %v1059
        %1253 = vst [vmem:[%s225 + $0x120] sm:$0xff] %v549
        %1254 = vst [vmem:[%s225 + $0x128] sm:$0xff] %v551
        %1255 = vst [vmem:[%s225 + $0x130] sm:$0xff] %v806
        %1256 = vst [vmem:[%s225 + $0x138] sm:$0xff] %v808
        %1257 = vst [vmem:[%s225 + $0x140] sm:$0xff] %v1063
        %1258 = vst [vmem:[%s225 + $0x148] sm:$0xff] %v1065
        %1259 = vst [vmem:[%s225 + $0x150] sm:$0xff] %v555
        %1260 = vst [vmem:[%s225 + $0x158] sm:$0xff] %v557
        %1261 = vst [vmem:[%s225 + $0x160] sm:$0xff] %v812
        %1262 = vst [vmem:[%s225 + $0x168] sm:$0xff] %v814
        %1263 = vst [vmem:[%s225 + $0x170] sm:$0xff] %v1069
        %1264 = vst [vmem:[%s225 + $0x178] sm:$0xff] %v1071
        %1265 = vst [vmem:[%s225 + $0x180] sm:$0xff] %v561
        %1266 = vst [vmem:[%s225 + $0x188] sm:$0xff] %v563
        %1267 = vst [vmem:[%s225 + $0x190] sm:$0xff] %v818
        %1268 = vst [vmem:[%s225 + $0x198] sm:$0xff] %v820
        %1269 = vst [vmem:[%s225 + $0x1a0] sm:$0xff] %v1075
        %1270 = vst [vmem:[%s225 + $0x1a8] sm:$0xff] %v1077
        %1271 = vst [vmem:[%s225 + $0x1b0] sm:$0xff] %v567
        %1272 = vst [vmem:[%s225 + $0x1b8] sm:$0xff] %v569
        %1273 = vst [vmem:[%s225 + $0x1c0] sm:$0xff] %v824
        %1274 = vst [vmem:[%s225 + $0x1c8] sm:$0xff] %v826
        %1275 = vst [vmem:[%s225 + $0x1d0] sm:$0xff] %v1081
        %1276 = vst [vmem:[%s225 + $0x1d8] sm:$0xff] %v1083
        %1277 = vst [vmem:[%s225 + $0x1e0] sm:$0xff] %v573
        %1278 = vst [vmem:[%s225 + $0x1e8] sm:$0xff] %v575
        %1279 = vst [vmem:[%s225 + $0x1f0] sm:$0xff] %v830
        %1280 = vst [vmem:[%s225 + $0x1f8] sm:$0xff] %v832
        %1281 = vst [vmem:[%s225 + $0x200] sm:$0xff] %v1087
        %1282 = vst [vmem:[%s225 + $0x208] sm:$0xff] %v1089
        %1283 = vst [vmem:[%s225 + $0x210] sm:$0xff] %v579
        %1284 = vst [vmem:[%s225 + $0x218] sm:$0xff] %v581
        %1285 = vst [vmem:[%s225 + $0x220] sm:$0xff] %v836
        %1286 = vst [vmem:[%s225 + $0x228] sm:$0xff] %v838
        %1287 = vst [vmem:[%s225 + $0x230] sm:$0xff] %v1093
        %1288 = vst [vmem:[%s225 + $0x238] sm:$0xff] %v1095
        %1289 = vst [vmem:[%s225 + $0x240] sm:$0xff] %v585
        %1290 = vst [vmem:[%s225 + $0x248] sm:$0xff] %v587
        %1291 = vst [vmem:[%s225 + $0x250] sm:$0xff] %v842
        %1292 = vst [vmem:[%s225 + $0x258] sm:$0xff] %v844
        %1293 = vst [vmem:[%s225 + $0x260] sm:$0xff] %v1099
        %1294 = vst [vmem:[%s225 + $0x268] sm:$0xff] %v1101
        %1295 = vst [vmem:[%s225 + $0x270] sm:$0xff] %v591
        %1296 = vst [vmem:[%s225 + $0x278] sm:$0xff] %v593
        %1297 = vst [vmem:[%s225 + $0x280] sm:$0xff] %v848
        %1298 = vst [vmem:[%s225 + $0x288] sm:$0xff] %v850
        %1299 = vst [vmem:[%s225 + $0x290] sm:$0xff] %v1105
        %1300 = vst [vmem:[%s225 + $0x298] sm:$0xff] %v1107
        %1301 = vst [vmem:[%s225 + $0x2a0] sm:$0xff] %v597
        %1302 = vst [vmem:[%s225 + $0x2a8] sm:$0xff] %v599
        %1303 = vst [vmem:[%s225 + $0x2b0] sm:$0xff] %v854
        %1304 = vst [vmem:[%s225 + $0x2b8] sm:$0xff] %v856
        %1305 = vst [vmem:[%s225 + $0x2c0] sm:$0xff] %v1111
        %1306 = vst [vmem:[%s225 + $0x2c8] sm:$0xff] %v1113
        %1307 = vst [vmem:[%s225 + $0x2d0] sm:$0xff] %v603
        %1308 = vst [vmem:[%s225 + $0x2d8] sm:$0xff] %v605
        %1309 = vst [vmem:[%s225 + $0x2e0] sm:$0xff] %v860
        %1310 = vst [vmem:[%s225 + $0x2e8] sm:$0xff] %v862
        %1311 = vst [vmem:[%s225 + $0x2f0] sm:$0xff] %v1117
        %1312 = vst [vmem:[%s225 + $0x2f8] sm:$0xff] %v1119
        %1313 = vst [vmem:[%s225 + $0x300] sm:$0xff] %v609
        %1314 = vst [vmem:[%s225 + $0x308] sm:$0xff] %v611
        %1315 = vst [vmem:[%s225 + $0x310] sm:$0xff] %v866
        %1316 = vst [vmem:[%s225 + $0x318] sm:$0xff] %v868
        %1317 = vst [vmem:[%s225 + $0x320] sm:$0xff] %v1123
        %1318 = vst [vmem:[%s225 + $0x328] sm:$0xff] %v1125
        %1319 = vst [vmem:[%s225 + $0x330] sm:$0xff] %v615
        %1320 = vst [vmem:[%s225 + $0x338] sm:$0xff] %v617
        %1321 = vst [vmem:[%s225 + $0x340] sm:$0xff] %v872
        %1322 = vst [vmem:[%s225 + $0x348] sm:$0xff] %v874
        %1323 = vst [vmem:[%s225 + $0x350] sm:$0xff] %v1129
        %1324 = vst [vmem:[%s225 + $0x358] sm:$0xff] %v1131
        %1325 = vst [vmem:[%s225 + $0x360] sm:$0xff] %v621
        %1326 = vst [vmem:[%s225 + $0x368] sm:$0xff] %v623
        %1327 = vst [vmem:[%s225 + $0x370] sm:$0xff] %v878
        %1328 = vst [vmem:[%s225 + $0x378] sm:$0xff] %v880
        %1329 = vst [vmem:[%s225 + $0x380] sm:$0xff] %v1135
        %1330 = vst [vmem:[%s225 + $0x388] sm:$0xff] %v1137
        %1331 = vst [vmem:[%s225 + $0x390] sm:$0xff] %v627
        %1332 = vst [vmem:[%s225 + $0x398] sm:$0xff] %v629
        %1333 = vst [vmem:[%s225 + $0x3a0] sm:$0xff] %v884
        %1334 = vst [vmem:[%s225 + $0x3a8] sm:$0xff] %v886
        %1335 = vst [vmem:[%s225 + $0x3b0] sm:$0xff] %v1141
        %1336 = vst [vmem:[%s225 + $0x3b8] sm:$0xff] %v1143
        %1337 = vst [vmem:[%s225 + $0x3c0] sm:$0xff] %v633
        %1338 = vst [vmem:[%s225 + $0x3c8] sm:$0xff] %v635
        %1339 = vst [vmem:[%s225 + $0x3d0] sm:$0xff] %v890
        %1340 = vst [vmem:[%s225 + $0x3d8] sm:$0xff] %v892
        %1341 = vst [vmem:[%s225 + $0x3e0] sm:$0xff] %v1147
        %1342 = vst [vmem:[%s225 + $0x3e8] sm:$0xff] %v1149
        %1343 = vst [vmem:[%s225 + $0x3f0] sm:$0xff] %v639
        %1344 = vst [vmem:[%s225 + $0x3f8] sm:$0xff] %v641
        %1345 = vst [vmem:[%s225 + $0x400] sm:$0xff] %v896
        %1346 = vst [vmem:[%s225 + $0x408] sm:$0xff] %v898
        %1347 = vst [vmem:[%s225 + $0x410] sm:$0xff] %v1153
        %1348 = vst [vmem:[%s225 + $0x418] sm:$0xff] %v1155
        %1349 = vst [vmem:[%s225 + $0x420] sm:$0xff] %v645
        %1350 = vst [vmem:[%s225 + $0x428] sm:$0xff] %v647
        %1351 = vst [vmem:[%s225 + $0x430] sm:$0xff] %v902
        %1352 = vst [vmem:[%s225 + $0x438] sm:$0xff] %v904
        %1353 = vst [vmem:[%s225 + $0x440] sm:$0xff] %v1159
        %1354 = vst [vmem:[%s225 + $0x448] sm:$0xff] %v1161
        %1355 = vst [vmem:[%s225 + $0x450] sm:$0xff] %v651
        %1356 = vst [vmem:[%s225 + $0x458] sm:$0xff] %v653
        %1357 = vst [vmem:[%s225 + $0x460] sm:$0xff] %v908
        %1358 = vst [vmem:[%s225 + $0x468] sm:$0xff] %v910
        %1359 = vst [vmem:[%s225 + $0x470] sm:$0xff] %v1165
        %1360 = vst [vmem:[%s225 + $0x478] sm:$0xff] %v1167
        %1361 = vst [vmem:[%s225 + $0x480] sm:$0xff] %v657
        %1362 = vst [vmem:[%s225 + $0x488] sm:$0xff] %v659
        %1363 = vst [vmem:[%s225 + $0x490] sm:$0xff] %v914
        %1364 = vst [vmem:[%s225 + $0x498] sm:$0xff] %v916
        %1365 = vst [vmem:[%s225 + $0x4a0] sm:$0xff] %v1171
        %1366 = vst [vmem:[%s225 + $0x4a8] sm:$0xff] %v1173
        %1367 = vst [vmem:[%s225 + $0x4b0] sm:$0xff] %v663
        %1368 = vst [vmem:[%s225 + $0x4b8] sm:$0xff] %v665
        %1369 = vst [vmem:[%s225 + $0x4c0] sm:$0xff] %v920
        %1370 = vst [vmem:[%s225 + $0x4c8] sm:$0xff] %v922
        %1371 = vst [vmem:[%s225 + $0x4d0] sm:$0xff] %v1177
        %1372 = vst [vmem:[%s225 + $0x4d8] sm:$0xff] %v1179
        %1373 = vst [vmem:[%s225 + $0x4e0] sm:$0xff] %v669
        %1374 = vst [vmem:[%s225 + $0x4e8] sm:$0xff] %v671
        %1375 = vst [vmem:[%s225 + $0x4f0] sm:$0xff] %v926
        %1376 = vst [vmem:[%s225 + $0x4f8] sm:$0xff] %v928
        %1377 = vst [vmem:[%s225 + $0x500] sm:$0xff] %v1183
        %1378 = vst [vmem:[%s225 + $0x508] sm:$0xff] %v1185
        %1379 = vst [vmem:[%s225 + $0x510] sm:$0xff] %v675
        %1380 = vst [vmem:[%s225 + $0x518] sm:$0xff] %v677
        %1381 = vst [vmem:[%s225 + $0x520] sm:$0xff] %v932
        %1382 = vst [vmem:[%s225 + $0x528] sm:$0xff] %v934
        %1383 = vst [vmem:[%s225 + $0x530] sm:$0xff] %v1189
        %1384 = vst [vmem:[%s225 + $0x538] sm:$0xff] %v1191
        %1385 = vst [vmem:[%s225 + $0x540] sm:$0xff] %v681
        %1386 = vst [vmem:[%s225 + $0x548] sm:$0xff] %v683
        %1387 = vst [vmem:[%s225 + $0x550] sm:$0xff] %v938
        %1388 = vst [vmem:[%s225 + $0x558] sm:$0xff] %v940
        %1389 = vst [vmem:[%s225 + $0x560] sm:$0xff] %v1195
        %1390 = vst [vmem:[%s225 + $0x568] sm:$0xff] %v1197
        %1391 = vst [vmem:[%s225 + $0x570] sm:$0xff] %v687
        %1392 = vst [vmem:[%s225 + $0x578] sm:$0xff] %v689
        %1393 = vst [vmem:[%s225 + $0x580] sm:$0xff] %v944
        %1394 = vst [vmem:[%s225 + $0x588] sm:$0xff] %v946
        %1395 = vst [vmem:[%s225 + $0x590] sm:$0xff] %v1201
        %1396 = vst [vmem:[%s225 + $0x598] sm:$0xff] %v1203
        %1397 = vst [vmem:[%s225 + $0x5a0] sm:$0xff] %v693
        %1398 = vst [vmem:[%s225 + $0x5a8] sm:$0xff] %v695
        %1399 = vst [vmem:[%s225 + $0x5b0] sm:$0xff] %v950
        %1400 = vst [vmem:[%s225 + $0x5b8] sm:$0xff] %v952
        %1401 = vst [vmem:[%s225 + $0x5c0] sm:$0xff] %v1207
        %1402 = vst [vmem:[%s225 + $0x5c8] sm:$0xff] %v1209
        %1403 = vst [vmem:[%s225 + $0x5d0] sm:$0xff] %v699
        %1404 = vst [vmem:[%s225 + $0x5d8] sm:$0xff] %v701
        %1405 = vst [vmem:[%s225 + $0x5e0] sm:$0xff] %v956
        %1406 = vst [vmem:[%s225 + $0x5e8] sm:$0xff] %v958
        %1407 = vst [vmem:[%s225 + $0x5f0] sm:$0xff] %v1213
        %1408 = vst [vmem:[%s225 + $0x5f8] sm:$0xff] %v1215
        %s1409 = sand.u32 %s111, 1
        %s1410 = scalar_lea.sflag [#allocation4], %s1409
        %s1411 = sand.u32 %s111, 1
        %s1412 = smul.addr %s1411, 1536
        %s1413 = scalar_lea.vmem [#allocation8], %s1412
        // Predicated region
        $region45: #{tpu_custom_call.1} parent=31 // pred_check
          %p1414 = pneg %p121
        $region46: #{tpu_custom_call.1} parent=31 // pred_check_branch
          %1416 = sbr.rel (%p1414) target = $region48
        $region47: #{tpu_custom_call.1} parent=31 // pred_region
          %s1417 = smul.u32 32, %s26
          %s1419 = ssub.s32 24576, 24576
          %1420 = vsyncadd %s1410, %s1419
          %s1421 = smul.addr %s1417, 6
          %s1422 = smul.addr %s25, 192
          %s1423 = sadd.s32 %s1421, %s1422
          %s1424 = smul.addr %s1423, 128
          %s1425 = scalar_lea.hbm %s3, %s1424
          %s1426 = sshll.u32 %s1413, 4
          %s1427 = int_to_ptr.vmem [resolvable:$true] %s1426
          %1432 = dma.vmem_to_hbm [thread:$0]  %s1427, 24576, %s1425, %s1410, 768, 768, 48
        $region48: #{tpu_custom_call.1} parent=31 // pred_fallthru
          _
      $region32: #{tpu_custom_call.1} parent=5 // pred_fallthru
        _
      %p1433 = scmp.le.s32.totalorder 2, %s16
      // Predicated region
      $region49: #{tpu_custom_call.1} parent=5 // pred_check
        %p1434 = pneg %p1433
      $region50: #{tpu_custom_call.1} parent=5 // pred_check_branch
        %1436 = sbr.rel (%p1434) target = $region52
      $region51: #{tpu_custom_call.1} parent=5 // pred_region
        %s1437 = ssub.s32 %s16, 2
        // Predicated region
        $region53: #{tpu_custom_call.1} parent=51 // pred_check
          %p1438 = pneg %p127
        $region54: #{tpu_custom_call.1} parent=51 // pred_check_branch
          %1440 = sbr.rel (%p1438) target = $region56
        $region55: #{tpu_custom_call.1} parent=51 // pred_region
          %s1441 = sand.u32 %s112, 1
          %s1442 = scalar_lea.sflag [#allocation4], %s1441
          %s1443 = sand.u32 %s112, 1
          %s1444 = smul.addr %s1443, 1536
          %s1445 = scalar_lea.vmem [#allocation8], %s1444
          %1446 = dma.done %s1442, 24576
        $region56: #{tpu_custom_call.1} parent=51 // pred_fallthru
          _
      $region52: #{tpu_custom_call.1} parent=5 // pred_fallthru
        _
    $region6: #{tpu_custom_call.1} parent=1 // loop_footer
      %s20 = sadd.s32 1, %s16
    $region7: #{tpu_custom_call.1} parent=1 // loop_footer_branch
      %15 = sbr.rel target = $region3
    $region8: #{tpu_custom_call.1} parent=1 // loop_exit
      _
    %1447 = vsyncpa [#allocation3], 1
    %s1448 = scalar_lea.sflag [#allocation3], 1
    %1449 = vsyncpa %s1448, 1
    %1450 = vsyncpa [#allocation6], 1
    %1451 = vsyncpa [#allocation4], 1
    %s1452 = scalar_lea.sflag [#allocation4], 1
    %1453 = vsyncpa %s1452, 1

</llo_original>
